<compile_context>
chip_gen: v6e
topology: v6e:2x2x1
jax: 0.10.0
libtpu: 0.0.40
codegen_flags: <defaults>
</compile_context>

<pallas_src>
import jax
import jax.numpy as jnp
from jax.experimental import pallas as pl
from jax.experimental.pallas import tpu as pltpu

HIDDEN = 768  # CodeBERT hidden size, matches nn.Linear(768, 1)


def _ranker_kernel(xv_ref, xb_ref, w_ref, b_ref, ov_ref, ob_ref, acc_v, acc_b):
    """Grid = (B_tiles, S_tiles); S is the trailing reduction axis.

    xv_ref/xb_ref : (tb, ts, H) encoder tiles (bf16).
    w_ref         : (1, H) f32 lane-major head weight, pre-scaled by 1/S.
    b_ref         : (1,)  f32 bias in SMEM.
    ov_ref/ob_ref : (tb, 1) f32 scores, written at the last S step.
    acc_v/acc_b   : (tb, H) f32 VMEM accumulators (persist across grid steps).
    """
    si = pl.program_id(1)

    # Per-tile partial sum over the sequence axis; cast on-chip, f32 accumulate.
    part_v = jnp.sum(xv_ref[...].astype(jnp.float32), axis=1)
    part_b = jnp.sum(xb_ref[...].astype(jnp.float32), axis=1)

    @pl.when(si == 0)
    def _():
        # First S step writes directly — no zero-then-add pass over the scratch.
        acc_v[...] = part_v
        acc_b[...] = part_b

    @pl.when(si > 0)
    def _():
        acc_v[...] += part_v
        acc_b[...] += part_b

    @pl.when(si == pl.num_programs(1) - 1)
    def _():
        # Lane-major weight, already * 1/S: elementwise mul + lane reduction
        # (VPU/XLU slots) instead of a tiny N=1 f32 MXU matmul.
        w = w_ref[...]                                   # (1, H)
        bias = b_ref[0]
        ov_ref[...] = (jnp.sum(acc_v[...] * w, axis=-1, keepdims=True)
                       + bias).astype(ov_ref.dtype)
        ob_ref[...] = (jnp.sum(acc_b[...] * w, axis=-1, keepdims=True)
                       + bias).astype(ob_ref.dtype)


def _vmem_limit_bytes():
    """Generation-aware scoped-VMEM limit: ~64 MiB on v5e/v6e (128 MiB
    physical), ~48 MiB on v7x (64 MiB physical per TensorCore)."""
    try:
        cap = pltpu.get_tpu_info().vmem_capacity_bytes
    except Exception:
        cap = 64 << 20  # be conservative (v7x per-core VMEM) if query fails
    return int(min((cap * 3) // 4, 64 << 20))


def _pick_tile(n, target, multiple):
    """Tile size for a dim of size n.

    Returns n itself when n <= target (full dim, always legal).  Otherwise the
    largest multiple of `multiple` <= target that divides n; if no divisor
    exists, returns the largest multiple of `multiple` <= target and the caller
    pads n up to a multiple of it (never falls back to the full dimension)."""
    if n <= target:
        return n
    base = max(multiple, (target // multiple) * multiple)
    for t in range(base, multiple - 1, -multiple):
        if n % t == 0:
            return t
    return base


def _pad_to_multiple(x, axis, tile):
    pad = (-x.shape[axis]) % tile
    if pad == 0:
        return x
    widths = [(0, 0)] * x.ndim
    widths[axis] = (0, pad)
    return jnp.pad(x, widths)


def pairwise_ranker_forward(h_vuln, h_benign, w, b, *, tb_target=16, ts_target=512):
    """h_vuln, h_benign: (B, S, H) encoder last_hidden_state.
    w: (H, 1), b: (1,).  Returns (score_vuln, score_benign), each (B, 1) f32."""
    B, S, H = h_vuln.shape
    assert h_benign.shape == (B, S, H) and H == HIDDEN

    # HBM traffic is the entire cost of this kernel: keep hidden states bf16
    # end-to-end through the DMA (f32 would double the bytes read).
    # TODO(synk): the upstream CodeBERT encoder should emit bf16 so this cast
    # fuses away instead of adding an extra pass over HBM.
    if h_vuln.dtype != jnp.bfloat16:
        h_vuln = h_vuln.astype(jnp.bfloat16)
    if h_benign.dtype != jnp.bfloat16:
        h_benign = h_benign.astype(jnp.bfloat16)

    # Fold 1/S (sequence mean over the ORIGINAL length) into the tiny head
    # weight once, lane-major, so the hot loop is a pure f32 sum.
    w_scaled = (w.astype(jnp.float32) / jnp.float32(S)).reshape(1, H)
    b1 = b.astype(jnp.float32).reshape(1)

    vmem_limit = _vmem_limit_bytes()

    # Keep >= 2 batch tiles when B allows it, so the "parallel" B axis spans
    # both v7x TensorCores (single-TC on v5e/v6e, harmless there).
    # TODO(synk): for B <= 8 on v7x the grid has a single parallel tile; a
    # second parallel split over S (partial-sum outputs combined in the
    # wrapper) would engage the second core.
    if B >= 16:
        tb_target = min(tb_target, max(8, (B // 16) * 8))
    tb = _pick_tile(B, tb_target, 8)

    # Size ts so the double-buffered inputs (2 inputs x 2 pipeline buffers of
    # tb*ts*H bf16) stay within ~3/4 of the scoped limit (headroom for
    # accumulators / weight / outputs).  Do not raise buffer depth beyond 2 —
    # spend VMEM on tile size instead.
    itemsize = 2  # bf16
    inputs_budget = (vmem_limit * 3) // 4
    ts_cap = max(8, inputs_budget // (4 * tb * H * itemsize))
    ts = _pick_tile(S, min(ts_target, ts_cap), 8)

    # Pad awkward B / S up to tile multiples: zero rows along S add nothing to
    # the sum (1/S already folded in), extra batch rows are sliced off below.
    h_vuln = _pad_to_multiple(h_vuln, 0, tb)
    h_benign = _pad_to_multiple(h_benign, 0, tb)
    h_vuln = _pad_to_multiple(h_vuln, 1, ts)
    h_benign = _pad_to_multiple(h_benign, 1, ts)
    Bp, Sp = h_vuln.shape[0], h_vuln.shape[1]

    grid = (Bp // tb, Sp // ts)

    out_v, out_b = pl.pallas_call(
        _ranker_kernel,
        out_shape=(jax.ShapeDtypeStruct((Bp, 1), jnp.float32),
                   jax.ShapeDtypeStruct((Bp, 1), jnp.float32)),
        grid_spec=pltpu.PrefetchScalarGridSpec(
            num_scalar_prefetch=0,
            grid=grid,
            in_specs=[
                pl.BlockSpec((tb, ts, H), lambda bi, si: (bi, si, 0)),
                pl.BlockSpec((tb, ts, H), lambda bi, si: (bi, si, 0)),
                pl.BlockSpec((1, H), lambda bi, si: (0, 0)),         # resident lane-major weight
                pl.BlockSpec(memory_space=pltpu.MemorySpace.SMEM),   # scalar bias
            ],
            out_specs=[
                pl.BlockSpec((tb, 1), lambda bi, si: (bi, 0)),
                pl.BlockSpec((tb, 1), lambda bi, si: (bi, 0)),
            ],
            scratch_shapes=[pltpu.VMEM((tb, H), jnp.float32),
                            pltpu.VMEM((tb, H), jnp.float32)],
        ),
        compiler_params=pltpu.CompilerParams(
            dimension_semantics=("parallel", "arbitrary"),
            vmem_limit_bytes=vmem_limit),
    )(h_vuln, h_benign, w_scaled, b1)

    return out_v[:B], out_b[:B]


if __name__ == "__main__":
    B, S, H = 2, 8, HIDDEN
    key = jax.random.PRNGKey(0)
    k_v, k_b, k_w, k_bias = jax.random.split(key, 4)

    # Synthetic "encoder last_hidden_state" for both branches, in bf16
    # (typical encoder output dtype) — NOT upcast before the kernel.
    h_vuln = jax.random.normal(k_v, (B, S, H), dtype=jnp.float32).astype(jnp.bfloat16)
    h_benign = jax.random.normal(k_b, (B, S, H), dtype=jnp.float32).astype(jnp.bfloat16)

    # Deterministic fc params (nn.Linear(768, 1) style uniform init).
    bound = 1.0 / jnp.sqrt(jnp.float32(H))
    w = jax.random.uniform(k_w, (H, 1), jnp.float32, -bound, bound)
    b = jax.random.uniform(k_bias, (1,), jnp.float32, -bound, bound)

    score_vuln, score_benign = pairwise_ranker_forward(h_vuln, h_benign, w, b)
    jax.block_until_ready((score_vuln, score_benign))

    # Pure-JAX reference check (f32 math on the same bf16 hidden states).
    ref_v = h_vuln.astype(jnp.float32).mean(axis=1) @ w + b
    ref_b = h_benign.astype(jnp.float32).mean(axis=1) @ w + b
    assert score_vuln.shape == (B, 1) and score_benign.shape == (B, 1)
    assert jnp.allclose(score_vuln, ref_v, atol=1e-3, rtol=1e-3)
    assert jnp.allclose(score_benign, ref_b, atol=1e-3, rtol=1e-3)

    print("KERNEL_OK")
</pallas_src>

<mosaic_0001>
module attributes {stable_mosaic.version = 11 : i64} {
  func.func @_ranker_kernel(%arg0: i32, %arg1: i32, %arg2: memref<2x8x768xbf16, #tpu.memory_space<vmem>>, %arg3: memref<2x8x768xbf16, #tpu.memory_space<vmem>>, %arg4: memref<1x768xf32, #tpu.memory_space<vmem>>, %arg5: memref<1xf32, #tpu.memory_space<smem>>, %arg6: memref<2x1xf32, #tpu.memory_space<vmem>>, %arg7: memref<2x1xf32, #tpu.memory_space<vmem>>, %arg8: memref<2x768xf32, #tpu.memory_space<vmem>>, %arg9: memref<2x768xf32, #tpu.memory_space<vmem>>) attributes {dimension_semantics = [#tpu.dimension_semantics<parallel>, #tpu.dimension_semantics<arbitrary>], iteration_bounds = array<i64: 1, 1>, scalar_prefetch = 0 : i64, scratch_operands = 2 : i64, tpu.core_type = #tpu.core_type<tc>, window_params = [{transform_indices = @transform_0, window_bounds = array<i64: 2, 8, 768>}, {transform_indices = @transform_1, window_bounds = array<i64: 2, 8, 768>}, {pipeline_mode = #tpu.pipeline_mode<synchronous>, transform_indices = @transform_2, window_bounds = array<i64: 1, 768>}, {transform_indices = @transform_3, window_bounds = array<i64: 1>}, {transform_indices = @transform_4, window_bounds = array<i64: 2, 1>}, {transform_indices = @transform_5, window_bounds = array<i64: 2, 1>}]} {
    %c0 = arith.constant 0 : index
    %c0_0 = arith.constant 0 : index
    %c0_1 = arith.constant 0 : index
    %0 = vector.load %arg2[%c0, %c0_0, %c0_1] : memref<2x8x768xbf16, #tpu.memory_space<vmem>>, vector<2x8x768xbf16>
    %1 = arith.extf %0 : vector<2x8x768xbf16> to vector<2x8x768xf32>
    %cst = arith.constant dense<0.000000e+00> : vector<2x768xf32>
    %2 = vector.multi_reduction <add>, %1, %cst [1] : vector<2x8x768xf32> to vector<2x768xf32>
    %c0_2 = arith.constant 0 : index
    %c0_3 = arith.constant 0 : index
    %c0_4 = arith.constant 0 : index
    %3 = vector.load %arg3[%c0_2, %c0_3, %c0_4] : memref<2x8x768xbf16, #tpu.memory_space<vmem>>, vector<2x8x768xbf16>
    %4 = arith.extf %3 : vector<2x8x768xbf16> to vector<2x8x768xf32>
    %cst_5 = arith.constant dense<0.000000e+00> : vector<2x768xf32>
    %5 = vector.multi_reduction <add>, %4, %cst_5 [1] : vector<2x8x768xf32> to vector<2x768xf32>
    %c0_i32 = arith.constant 0 : i32
    %6 = arith.cmpi eq, %arg1, %c0_i32 : i32
    %7 = arith.extui %6 : i1 to i32
    %c0_i32_6 = arith.constant 0 : i32
    %8 = arith.cmpi ne, %7, %c0_i32_6 : i32
    scf.if %8 {
      %c0_11 = arith.constant 0 : index
      %c0_12 = arith.constant 0 : index
      %15 = vector.load %arg8[%c0_11, %c0_12] : memref<2x768xf32, #tpu.memory_space<vmem>>, vector<2x768xf32>
      tpu.vector_store %arg8[%c0_11, %c0_12], %2 {strides = array<i32>} : memref<2x768xf32, #tpu.memory_space<vmem>>, vector<2x768xf32>,
      %c0_13 = arith.constant 0 : index
      %c0_14 = arith.constant 0 : index
      %16 = vector.load %arg9[%c0_13, %c0_14] : memref<2x768xf32, #tpu.memory_space<vmem>>, vector<2x768xf32>
      tpu.vector_store %arg9[%c0_13, %c0_14], %5 {strides = array<i32>} : memref<2x768xf32, #tpu.memory_space<vmem>>, vector<2x768xf32>,
    } else {
    }
    %c0_i32_7 = arith.constant 0 : i32
    %9 = arith.cmpi sgt, %arg1, %c0_i32_7 : i32
    %10 = arith.extui %9 : i1 to i32
    %c0_i32_8 = arith.constant 0 : i32
    %11 = arith.cmpi ne, %10, %c0_i32_8 : i32
    scf.if %11 {
      %c0_11 = arith.constant 0 : index
      %c0_12 = arith.constant 0 : index
      %15 = vector.load %arg8[%c0_11, %c0_12] : memref<2x768xf32, #tpu.memory_space<vmem>>, vector<2x768xf32>
      %16 = arith.addf %15, %2 : vector<2x768xf32>
      %c0_13 = arith.constant 0 : index
      %c0_14 = arith.constant 0 : index
      %17 = vector.load %arg8[%c0_13, %c0_14] : memref<2x768xf32, #tpu.memory_space<vmem>>, vector<2x768xf32>
      tpu.vector_store %arg8[%c0_13, %c0_14], %16 {strides = array<i32>} : memref<2x768xf32, #tpu.memory_space<vmem>>, vector<2x768xf32>,
      %c0_15 = arith.constant 0 : index
      %c0_16 = arith.constant 0 : index
      %18 = vector.load %arg9[%c0_15, %c0_16] : memref<2x768xf32, #tpu.memory_space<vmem>>, vector<2x768xf32>
      %19 = arith.addf %18, %5 : vector<2x768xf32>
      %c0_17 = arith.constant 0 : index
      %c0_18 = arith.constant 0 : index
      %20 = vector.load %arg9[%c0_17, %c0_18] : memref<2x768xf32, #tpu.memory_space<vmem>>, vector<2x768xf32>
      tpu.vector_store %arg9[%c0_17, %c0_18], %19 {strides = array<i32>} : memref<2x768xf32, #tpu.memory_space<vmem>>, vector<2x768xf32>,
    } else {
    }
    %c0_i32_9 = arith.constant 0 : i32
    %12 = arith.cmpi eq, %arg1, %c0_i32_9 : i32
    %13 = arith.extui %12 : i1 to i32
    %c0_i32_10 = arith.constant 0 : i32
    %14 = arith.cmpi ne, %13, %c0_i32_10 : i32
    scf.if %14 {
      %c0_11 = arith.constant 0 : index
      %c0_12 = arith.constant 0 : index
      %15 = vector.load %arg4[%c0_11, %c0_12] : memref<1x768xf32, #tpu.memory_space<vmem>>, vector<1x768xf32>
      %c0_13 = arith.constant 0 : index
      %16 = memref.load %arg5[%c0_13] : memref<1xf32, #tpu.memory_space<smem>>
      %c0_14 = arith.constant 0 : index
      %c0_15 = arith.constant 0 : index
      %17 = vector.load %arg8[%c0_14, %c0_15] : memref<2x768xf32, #tpu.memory_space<vmem>>, vector<2x768xf32>
      %18 = vector.broadcast %15 : vector<1x768xf32> to vector<2x768xf32>
      %19 = arith.mulf %17, %18 : vector<2x768xf32>
      %cst_16 = arith.constant dense<0.000000e+00> : vector<2xf32>
      %20 = vector.multi_reduction <add>, %19, %cst_16 [1] : vector<2x768xf32> to vector<2xf32>
      %21 = vector.shape_cast %20 : vector<2xf32> to vector<2x1xf32>
      %22 = vector.broadcast %16 : f32 to vector<2x1xf32>
      %23 = arith.addf %21, %22 : vector<2x1xf32>
      %c0_17 = arith.constant 0 : index
      %c0_18 = arith.constant 0 : index
      %24 = vector.load %arg6[%c0_17, %c0_18] : memref<2x1xf32, #tpu.memory_space<vmem>>, vector<2x1xf32>
      tpu.vector_store %arg6[%c0_17, %c0_18], %23 {strides = array<i32>} : memref<2x1xf32, #tpu.memory_space<vmem>>, vector<2x1xf32>,
      %c0_19 = arith.constant 0 : index
      %c0_20 = arith.constant 0 : index
      %25 = vector.load %arg9[%c0_19, %c0_20] : memref<2x768xf32, #tpu.memory_space<vmem>>, vector<2x768xf32>
      %26 = vector.broadcast %15 : vector<1x768xf32> to vector<2x768xf32>
      %27 = arith.mulf %25, %26 : vector<2x768xf32>
      %cst_21 = arith.constant dense<0.000000e+00> : vector<2xf32>
      %28 = vector.multi_reduction <add>, %27, %cst_21 [1] : vector<2x768xf32> to vector<2xf32>
      %29 = vector.shape_cast %28 : vector<2xf32> to vector<2x1xf32>
      %30 = vector.broadcast %16 : f32 to vector<2x1xf32>
      %31 = arith.addf %29, %30 : vector<2x1xf32>
      %c0_22 = arith.constant 0 : index
      %c0_23 = arith.constant 0 : index
      %32 = vector.load %arg7[%c0_22, %c0_23] : memref<2x1xf32, #tpu.memory_space<vmem>>, vector<2x1xf32>
      tpu.vector_store %arg7[%c0_22, %c0_23], %31 {strides = array<i32>} : memref<2x1xf32, #tpu.memory_space<vmem>>, vector<2x1xf32>,
    } else {
    }
    return
  }
  func.func @transform_0(%arg0: i32, %arg1: i32) -> (i32, i32, i32) {
    %c0_i32 = arith.constant 0 : i32
    %c0_i32_0 = arith.constant 0 : i32
    return %arg0, %arg1, %c0_i32 : i32, i32, i32
  }
  func.func @transform_1(%arg0: i32, %arg1: i32) -> (i32, i32, i32) {
    %c0_i32 = arith.constant 0 : i32
    %c0_i32_0 = arith.constant 0 : i32
    return %arg0, %arg1, %c0_i32 : i32, i32, i32
  }
  func.func @transform_2(%arg0: i32, %arg1: i32) -> (i32, i32) {
    %c0_i32 = arith.constant 0 : i32
    %c0_i32_0 = arith.constant 0 : i32
    %c0_i32_1 = arith.constant 0 : i32
    return %c0_i32, %c0_i32_0 : i32, i32
  }
  func.func @transform_3(%arg0: i32, %arg1: i32) -> i32 {
    %c0_i32 = arith.constant 0 : i32
    %c0_i32_0 = arith.constant 0 : i32
    return %c0_i32 : i32
  }
  func.func @transform_4(%arg0: i32, %arg1: i32) -> (i32, i32) {
    %c0_i32 = arith.constant 0 : i32
    %c0_i32_0 = arith.constant 0 : i32
    return %arg0, %c0_i32 : i32, i32
  }
  func.func @transform_5(%arg0: i32, %arg1: i32) -> (i32, i32) {
    %c0_i32 = arith.constant 0 : i32
    %c0_i32_0 = arith.constant 0 : i32
    return %arg0, %c0_i32 : i32, i32
  }
}

</mosaic_0001>

<llo_original>
// kernel: tpu_custom_call.1
$region0: #{tpu_custom_call.1}
  #allocation0 [shape = 'u32[]', space=smem, size = 0x4, offset = 0x4, fixed_abs, tag = 'smem constant byte address 0x4 - core index']
  #allocation1 [shape = 'u32[144,128]{1,0:T(1,128)}', space=vmem, size = 0x12000, scoped, tag = 'internal scratch']
  #allocation2 [shape = 'f32[2,768]{1,0:T(2,128)}', space=vmem, size = 0x1800, scoped, tag = 'scratch operand']
  #allocation3 [shape = 'f32[2,768]{1,0:T(2,128)}', space=vmem, size = 0x1800, scoped, tag = 'scratch operand']
  #allocation4 [shape = 'f32[1]{0:T(128)S(6)}', space=smem, size = 0x200, scoped, tag = 'scoped memory for tpu_custom_call.1']
  %s0 = inlined_call_operand.hbm [shape: bf16[2,8,768], index: 0, kind: input, shape index: {}]
  %s1 = inlined_call_operand.hbm [shape: bf16[2,8,768], index: 1, kind: input, shape index: {}]
  %s2 = inlined_call_operand.hbm [shape: f32[1,768], index: 2, kind: input, shape index: {}]
  %s3 = inlined_call_operand.<no memory space> [shape: f32[1], index: 3, kind: input, shape index: {}]
  %s4 = inlined_call_operand.vmem [shape: f32[2,1], index: 4, kind: output, shape index: {0}]
  %s5 = inlined_call_operand.vmem [shape: f32[2,1], index: 5, kind: output, shape index: {1}]
  %6 = xla_tuple %s4, %s5
  %s7 = sld [smem:[#allocation0]]
  $region58: #{tpu_custom_call.1} parent=0
    _
  %s9 = ssub.s32 1, %s7
  %s10 = scalar_select 0, %s9, %s7
  %11 = sst [smem:[#allocation4]] %s3
  $region1: #{tpu_custom_call.1} parent=0
    #allocation5 [shape = 'u8[24576]{0}', space=vmem, size = 0x6000, scoped, tag = 'input window, operand 0, single buffered']
    #allocation6 [shape = 's32[1]{0}', space=sflag, size = 0x4, scoped, tag = 'scoped memory for tpu_custom_call.1']
    #allocation7 [shape = 'u8[24576]{0}', space=vmem, size = 0x6000, scoped, tag = 'input window, operand 1, single buffered']
    #allocation8 [shape = 's32[1]{0}', space=sflag, size = 0x4, scoped, tag = 'scoped memory for tpu_custom_call.1']
    #allocation9 [shape = 'u8[3072]{0}', space=vmem, size = 0xc00, scoped, tag = 'input window, operand 2, single buffered']
    %12 = vsyncpa [#allocation6], 0
    %13 = vsyncpa [#allocation8], 0
    // Predicated region
    $region2: #{tpu_custom_call.1} parent=1 // pred_check
      _
    $region3: #{tpu_custom_call.1} parent=1 // pred_check_branch
      %15 = sbr.rel (0) target = $region5
    $region4: #{tpu_custom_call.1} parent=1 // pred_region
      %s17 = ssub.s32 768, 768
      %18 = vsyncadd [#allocation6], %s17
      %s19 = sshll.u32 [#allocation5], 4
      %s20 = int_to_ptr.vmem [resolvable:$true] %s19
      %25 = dma.hbm_to_vmem [thread:$0]  %s0, 768, %s20, [#allocation6], 384, 384, 24
    $region5: #{tpu_custom_call.1} parent=1 // pred_fallthru
      _
    // Predicated region
    $region6: #{tpu_custom_call.1} parent=1 // pred_check
      _
    $region7: #{tpu_custom_call.1} parent=1 // pred_check_branch
      %27 = sbr.rel (0) target = $region9
    $region8: #{tpu_custom_call.1} parent=1 // pred_region
      %s29 = ssub.s32 768, 768
      %30 = vsyncadd [#allocation8], %s29
      %s31 = sshll.u32 [#allocation7], 4
      %s32 = int_to_ptr.vmem [resolvable:$true] %s31
      %37 = dma.hbm_to_vmem [thread:$0]  %s1, 768, %s32, [#allocation8], 384, 384, 24
    $region9: #{tpu_custom_call.1} parent=1 // pred_fallthru
      _
    // Predicated region
    $region10: #{tpu_custom_call.1} parent=1 // pred_check
      _
    $region11: #{tpu_custom_call.1} parent=1 // pred_check_branch
      %39 = sbr.rel (0) target = $region13
    $region12: #{tpu_custom_call.1} parent=1 // pred_region
      %s41 = ssub.s32 96, 96
      %42 = vsyncadd [#allocation8], %s41
      %s44 = sshll.u32 [#allocation9], 4
      %s45 = int_to_ptr.vmem [resolvable:$true] %s44
      %47 = dma.hbm_to_vmem [thread:$0]  %s2, 96, %s45, [#allocation8]
    $region13: #{tpu_custom_call.1} parent=1 // pred_fallthru
      _
    // Predicated region
    $region14: #{tpu_custom_call.1} parent=1 // pred_check
      _
    $region15: #{tpu_custom_call.1} parent=1 // pred_check_branch
      %49 = sbr.rel (0) target = $region17
    $region16: #{tpu_custom_call.1} parent=1 // pred_region
      _
    $region17: #{tpu_custom_call.1} parent=1 // pred_fallthru
      _
    // Predicated region
    $region18: #{tpu_custom_call.1} parent=1 // pred_check
      _
    $region19: #{tpu_custom_call.1} parent=1 // pred_check_branch
      %51 = sbr.rel (0) target = $region21
    $region20: #{tpu_custom_call.1} parent=1 // pred_region
      %52 = dma.done [#allocation6], 768
    $region21: #{tpu_custom_call.1} parent=1 // pred_fallthru
      _
    // Predicated region
    $region22: #{tpu_custom_call.1} parent=1 // pred_check
      _
    $region23: #{tpu_custom_call.1} parent=1 // pred_check_branch
      %54 = sbr.rel (0) target = $region25
    $region24: #{tpu_custom_call.1} parent=1 // pred_region
      %55 = dma.done [#allocation8], 768
    $region25: #{tpu_custom_call.1} parent=1 // pred_fallthru
      _
    // Predicated region
    $region26: #{tpu_custom_call.1} parent=1 // pred_check
      _
    $region27: #{tpu_custom_call.1} parent=1 // pred_check_branch
      %57 = sbr.rel (0) target = $region29
    $region28: #{tpu_custom_call.1} parent=1 // pred_region
      %58 = dma.done [#allocation8], 96
    $region29: #{tpu_custom_call.1} parent=1 // pred_fallthru
      _
    %v59 = vld [vmem:[#allocation5] sm:$0xff]
    %v60 = vld [vmem:[#allocation5 + $0x8] sm:$0xff]
    %v61 = vld [vmem:[#allocation5 + $0x10] sm:$0xff]
    %v62 = vld [vmem:[#allocation5 + $0x18] sm:$0xff]
    %v63 = vld [vmem:[#allocation5 + $0x20] sm:$0xff]
    %v64 = vld [vmem:[#allocation5 + $0x28] sm:$0xff]
    %v65 = vunpack.c.l.bf16 %v59
    %v66 = vunpack.c.h.bf16 %v59
    %v67 = vunpack.c.l.bf16 %v60
    %v68 = vunpack.c.h.bf16 %v60
    %v69 = vunpack.c.l.bf16 %v61
    %v70 = vunpack.c.h.bf16 %v61
    %v71 = vunpack.c.l.bf16 %v62
    %v72 = vunpack.c.h.bf16 %v62
    %v73 = vunpack.c.l.bf16 %v63
    %v74 = vunpack.c.h.bf16 %v63
    %v75 = vunpack.c.l.bf16 %v64
    %v76 = vunpack.c.h.bf16 %v64
    %v77 = vrot.slane %v65, 4
    %v78 = vadd.f32 %v65, %v77
    %v79 = vrot.slane %v78, 2
    %v80 = vadd.f32 %v78, %v79
    %v81 = vrot.slane %v80, 1
    %v82 = vadd.f32 %v80, %v81
    %v83 = vrot.slane %v66, 4
    %v84 = vadd.f32 %v66, %v83
    %v85 = vrot.slane %v84, 2
    %v86 = vadd.f32 %v84, %v85
    %v87 = vrot.slane %v86, 1
    %v88 = vadd.f32 %v86, %v87
    %v89 = vrot.slane %v67, 4
    %v90 = vadd.f32 %v67, %v89
    %v91 = vrot.slane %v90, 2
    %v92 = vadd.f32 %v90, %v91
    %v93 = vrot.slane %v92, 1
    %v94 = vadd.f32 %v92, %v93
    %v95 = vrot.slane %v68, 4
    %v96 = vadd.f32 %v68, %v95
    %v97 = vrot.slane %v96, 2
    %v98 = vadd.f32 %v96, %v97
    %v99 = vrot.slane %v98, 1
    %v100 = vadd.f32 %v98, %v99
    %v101 = vrot.slane %v69, 4
    %v102 = vadd.f32 %v69, %v101
    %v103 = vrot.slane %v102, 2
    %v104 = vadd.f32 %v102, %v103
    %v105 = vrot.slane %v104, 1
    %v106 = vadd.f32 %v104, %v105
    %v107 = vrot.slane %v70, 4
    %v108 = vadd.f32 %v70, %v107
    %v109 = vrot.slane %v108, 2
    %v110 = vadd.f32 %v108, %v109
    %v111 = vrot.slane %v110, 1
    %v112 = vadd.f32 %v110, %v111
    %v113 = vrot.slane %v71, 4
    %v114 = vadd.f32 %v71, %v113
    %v115 = vrot.slane %v114, 2
    %v116 = vadd.f32 %v114, %v115
    %v117 = vrot.slane %v116, 1
    %v118 = vadd.f32 %v116, %v117
    %v119 = vrot.slane %v72, 4
    %v120 = vadd.f32 %v72, %v119
    %v121 = vrot.slane %v120, 2
    %v122 = vadd.f32 %v120, %v121
    %v123 = vrot.slane %v122, 1
    %v124 = vadd.f32 %v122, %v123
    %v125 = vrot.slane %v73, 4
    %v126 = vadd.f32 %v73, %v125
    %v127 = vrot.slane %v126, 2
    %v128 = vadd.f32 %v126, %v127
    %v129 = vrot.slane %v128, 1
    %v130 = vadd.f32 %v128, %v129
    %v131 = vrot.slane %v74, 4
    %v132 = vadd.f32 %v74, %v131
    %v133 = vrot.slane %v132, 2
    %v134 = vadd.f32 %v132, %v133
    %v135 = vrot.slane %v134, 1
    %v136 = vadd.f32 %v134, %v135
    %v137 = vrot.slane %v75, 4
    %v138 = vadd.f32 %v75, %v137
    %v139 = vrot.slane %v138, 2
    %v140 = vadd.f32 %v138, %v139
    %v141 = vrot.slane %v140, 1
    %v142 = vadd.f32 %v140, %v141
    %v143 = vrot.slane %v76, 4
    %v144 = vadd.f32 %v76, %v143
    %v145 = vrot.slane %v144, 2
    %v146 = vadd.f32 %v144, %v145
    %v147 = vrot.slane %v146, 1
    %v148 = vadd.f32 %v146, %v147
    %v149 = vld [vmem:[#allocation7] sm:$0xff]
    %v150 = vld [vmem:[#allocation7 + $0x8] sm:$0xff]
    %v151 = vld [vmem:[#allocation7 + $0x10] sm:$0xff]
    %v152 = vld [vmem:[#allocation7 + $0x18] sm:$0xff]
    %v153 = vld [vmem:[#allocation7 + $0x20] sm:$0xff]
    %v154 = vld [vmem:[#allocation7 + $0x28] sm:$0xff]
    %v155 = vunpack.c.l.bf16 %v149
    %v156 = vunpack.c.h.bf16 %v149
    %v157 = vunpack.c.l.bf16 %v150
    %v158 = vunpack.c.h.bf16 %v150
    %v159 = vunpack.c.l.bf16 %v151
    %v160 = vunpack.c.h.bf16 %v151
    %v161 = vunpack.c.l.bf16 %v152
    %v162 = vunpack.c.h.bf16 %v152
    %v163 = vunpack.c.l.bf16 %v153
    %v164 = vunpack.c.h.bf16 %v153
    %v165 = vunpack.c.l.bf16 %v154
    %v166 = vunpack.c.h.bf16 %v154
    %v167 = vrot.slane %v155, 4
    %v168 = vadd.f32 %v155, %v167
    %v169 = vrot.slane %v168, 2
    %v170 = vadd.f32 %v168, %v169
    %v171 = vrot.slane %v170, 1
    %v172 = vadd.f32 %v170, %v171
    %v173 = vrot.slane %v156, 4
    %v174 = vadd.f32 %v156, %v173
    %v175 = vrot.slane %v174, 2
    %v176 = vadd.f32 %v174, %v175
    %v177 = vrot.slane %v176, 1
    %v178 = vadd.f32 %v176, %v177
    %v179 = vrot.slane %v157, 4
    %v180 = vadd.f32 %v157, %v179
    %v181 = vrot.slane %v180, 2
    %v182 = vadd.f32 %v180, %v181
    %v183 = vrot.slane %v182, 1
    %v184 = vadd.f32 %v182, %v183
    %v185 = vrot.slane %v158, 4
    %v186 = vadd.f32 %v158, %v185
    %v187 = vrot.slane %v186, 2
    %v188 = vadd.f32 %v186, %v187
    %v189 = vrot.slane %v188, 1
    %v190 = vadd.f32 %v188, %v189
    %v191 = vrot.slane %v159, 4
    %v192 = vadd.f32 %v159, %v191
    %v193 = vrot.slane %v192, 2
    %v194 = vadd.f32 %v192, %v193
    %v195 = vrot.slane %v194, 1
    %v196 = vadd.f32 %v194, %v195
    %v197 = vrot.slane %v160, 4
    %v198 = vadd.f32 %v160, %v197
    %v199 = vrot.slane %v198, 2
    %v200 = vadd.f32 %v198, %v199
    %v201 = vrot.slane %v200, 1
    %v202 = vadd.f32 %v200, %v201
    %v203 = vrot.slane %v161, 4
    %v204 = vadd.f32 %v161, %v203
    %v205 = vrot.slane %v204, 2
    %v206 = vadd.f32 %v204, %v205
    %v207 = vrot.slane %v206, 1
    %v208 = vadd.f32 %v206, %v207
    %v209 = vrot.slane %v162, 4
    %v210 = vadd.f32 %v162, %v209
    %v211 = vrot.slane %v210, 2
    %v212 = vadd.f32 %v210, %v211
    %v213 = vrot.slane %v212, 1
    %v214 = vadd.f32 %v212, %v213
    %v215 = vrot.slane %v163, 4
    %v216 = vadd.f32 %v163, %v215
    %v217 = vrot.slane %v216, 2
    %v218 = vadd.f32 %v216, %v217
    %v219 = vrot.slane %v218, 1
    %v220 = vadd.f32 %v218, %v219
    %v221 = vrot.slane %v164, 4
    %v222 = vadd.f32 %v164, %v221
    %v223 = vrot.slane %v222, 2
    %v224 = vadd.f32 %v222, %v223
    %v225 = vrot.slane %v224, 1
    %v226 = vadd.f32 %v224, %v225
    %v227 = vrot.slane %v165, 4
    %v228 = vadd.f32 %v165, %v227
    %v229 = vrot.slane %v228, 2
    %v230 = vadd.f32 %v228, %v229
    %v231 = vrot.slane %v230, 1
    %v232 = vadd.f32 %v230, %v231
    %v233 = vrot.slane %v166, 4
    %v234 = vadd.f32 %v166, %v233
    %v235 = vrot.slane %v234, 2
    %v236 = vadd.f32 %v234, %v235
    %v237 = vrot.slane %v236, 1
    %v238 = vadd.f32 %v236, %v237
    %p239 = scmp.eq.s32.totalorder 0, 0
    // Predicated region
    $region30: #{tpu_custom_call.1} parent=1 // pred_check
      %p240 = pneg %p239
    $region31: #{tpu_custom_call.1} parent=1 // pred_check_branch
      %242 = sbr.rel (%p240) target = $region33
    $region32: #{tpu_custom_call.1} parent=1 // pred_region
      %v255 = vcombine.low %v82, %v88
      %v256 = vcombine.low %v94, %v100
      %v258 = vunpack.c.l.s4 1983009808
      %v259 = vunpack.c.0.s8 %v258
      %v260 = vlaneseq
      %v261 = vshrl.u32 %v260, 7
      %v262 = vsub.s32 %v259, %v261
      %v263 = vrot.slane %v255, %v262
      %v265 = vunpack.c.l.s4 1983009808
      %v266 = vunpack.c.0.s8 %v265
      %v267 = vlaneseq
      %v268 = vshrl.u32 %v267, 7
      %v269 = vsub.s32 %v266, %v268
      %v270 = vrot.slane %v256, %v269
      %v271 = vcombine.low %v263, %v270
      %v272 = vcombine.low %v106, %v112
      %v274 = vunpack.c.l.s4 1983009808
      %v275 = vunpack.c.0.s8 %v274
      %v276 = vlaneseq
      %v277 = vshrl.u32 %v276, 7
      %v278 = vsub.s32 %v275, %v277
      %v279 = vrot.slane %v272, %v278
      %v280 = vcombine.low %v118, %v124
      %v281 = vcombine.low %v130, %v136
      %v283 = vunpack.c.l.s4 1983009808
      %v284 = vunpack.c.0.s8 %v283
      %v285 = vlaneseq
      %v286 = vshrl.u32 %v285, 7
      %v287 = vsub.s32 %v284, %v286
      %v288 = vrot.slane %v280, %v287
      %v290 = vunpack.c.l.s4 1983009808
      %v291 = vunpack.c.0.s8 %v290
      %v292 = vlaneseq
      %v293 = vshrl.u32 %v292, 7
      %v294 = vsub.s32 %v291, %v293
      %v295 = vrot.slane %v281, %v294
      %v296 = vcombine.low %v288, %v295
      %v297 = vcombine.low %v142, %v148
      %v299 = vunpack.c.l.s4 1983009808
      %v300 = vunpack.c.0.s8 %v299
      %v301 = vlaneseq
      %v302 = vshrl.u32 %v301, 7
      %v303 = vsub.s32 %v300, %v302
      %v304 = vrot.slane %v297, %v303
      %vm305 = vcmask 1044484
      %v306 = vsel %vm305, %v271, %v271
      %vm307 = vcmask 1046534
      %v308 = vsel %vm307, %v271, %v306
      %v309 = vrot.slane %v296, 7
      %vm310 = vcmask 1041409
      %v311 = vsel %vm310, %v309, %v308
      %vm312 = vcmask 1043459
      %v313 = vsel %vm312, %v309, %v311
      %vm314 = vcmask 1045509
      %v315 = vsel %vm314, %v309, %v313
      %vm316 = vcmask 1047559
      %v317 = vsel %vm316, %v309, %v315
      %v318 = vsel %vm305, %v279, %v279
      %v319 = vsel %vm307, %v279, %v318
      %v320 = vrot.slane %v304, 7
      %v321 = vsel %vm310, %v320, %v319
      %v322 = vsel %vm312, %v320, %v321
      %v323 = vsel %vm314, %v320, %v322
      %v324 = vsel %vm316, %v320, %v323
      %327 = vst [vmem:[#allocation2] sm:$0xff] %v317
      %328 = vst [vmem:[#allocation2 + $0x8] sm:$0xf] %v324
      %v341 = vcombine.low %v172, %v178
      %v342 = vcombine.low %v184, %v190
      %v344 = vunpack.c.l.s4 1983009808
      %v345 = vunpack.c.0.s8 %v344
      %v346 = vlaneseq
      %v347 = vshrl.u32 %v346, 7
      %v348 = vsub.s32 %v345, %v347
      %v349 = vrot.slane %v341, %v348
      %v351 = vunpack.c.l.s4 1983009808
      %v352 = vunpack.c.0.s8 %v351
      %v353 = vlaneseq
      %v354 = vshrl.u32 %v353, 7
      %v355 = vsub.s32 %v352, %v354
      %v356 = vrot.slane %v342, %v355
      %v357 = vcombine.low %v349, %v356
      %v358 = vcombine.low %v196, %v202
      %v360 = vunpack.c.l.s4 1983009808
      %v361 = vunpack.c.0.s8 %v360
      %v362 = vlaneseq
      %v363 = vshrl.u32 %v362, 7
      %v364 = vsub.s32 %v361, %v363
      %v365 = vrot.slane %v358, %v364
      %v366 = vcombine.low %v208, %v214
      %v367 = vcombine.low %v220, %v226
      %v369 = vunpack.c.l.s4 1983009808
      %v370 = vunpack.c.0.s8 %v369
      %v371 = vlaneseq
      %v372 = vshrl.u32 %v371, 7
      %v373 = vsub.s32 %v370, %v372
      %v374 = vrot.slane %v366, %v373
      %v376 = vunpack.c.l.s4 1983009808
      %v377 = vunpack.c.0.s8 %v376
      %v378 = vlaneseq
      %v379 = vshrl.u32 %v378, 7
      %v380 = vsub.s32 %v377, %v379
      %v381 = vrot.slane %v367, %v380
      %v382 = vcombine.low %v374, %v381
      %v383 = vcombine.low %v232, %v238
      %v385 = vunpack.c.l.s4 1983009808
      %v386 = vunpack.c.0.s8 %v385
      %v387 = vlaneseq
      %v388 = vshrl.u32 %v387, 7
      %v389 = vsub.s32 %v386, %v388
      %v390 = vrot.slane %v383, %v389
      %v391 = vsel %vm305, %v357, %v357
      %v392 = vsel %vm307, %v357, %v391
      %v393 = vrot.slane %v382, 7
      %v394 = vsel %vm310, %v393, %v392
      %v395 = vsel %vm312, %v393, %v394
      %v396 = vsel %vm314, %v393, %v395
      %v397 = vsel %vm316, %v393, %v396
      %v398 = vsel %vm305, %v365, %v365
      %v399 = vsel %vm307, %v365, %v398
      %v400 = vrot.slane %v390, 7
      %v401 = vsel %vm310, %v400, %v399
      %v402 = vsel %vm312, %v400, %v401
      %v403 = vsel %vm314, %v400, %v402
      %v404 = vsel %vm316, %v400, %v403
      %407 = vst [vmem:[#allocation3] sm:$0xff] %v397
      %408 = vst [vmem:[#allocation3 + $0x8] sm:$0xf] %v404
    $region33: #{tpu_custom_call.1} parent=1 // pred_fallthru
      _
    %p409 = scmp.gt.s32.totalorder 0, 0
    // Predicated region
    $region34: #{tpu_custom_call.1} parent=1 // pred_check
      %p410 = pneg %p409
    $region35: #{tpu_custom_call.1} parent=1 // pred_check_branch
      %412 = sbr.rel (%p410) target = $region37
    $region36: #{tpu_custom_call.1} parent=1 // pred_region
      %v413 = vld [vmem:[#allocation2] sm:$0xff]
      %v414 = vld [vmem:[#allocation2 + $0x8] sm:$0xf]
      %v427 = vcombine.low %v82, %v88
      %v428 = vcombine.low %v94, %v100
      %v430 = vunpack.c.l.s4 1983009808
      %v431 = vunpack.c.0.s8 %v430
      %v432 = vlaneseq
      %v433 = vshrl.u32 %v432, 7
      %v434 = vsub.s32 %v431, %v433
      %v435 = vrot.slane %v427, %v434
      %v437 = vunpack.c.l.s4 1983009808
      %v438 = vunpack.c.0.s8 %v437
      %v439 = vlaneseq
      %v440 = vshrl.u32 %v439, 7
      %v441 = vsub.s32 %v438, %v440
      %v442 = vrot.slane %v428, %v441
      %v443 = vcombine.low %v435, %v442
      %v444 = vcombine.low %v106, %v112
      %v446 = vunpack.c.l.s4 1983009808
      %v447 = vunpack.c.0.s8 %v446
      %v448 = vlaneseq
      %v449 = vshrl.u32 %v448, 7
      %v450 = vsub.s32 %v447, %v449
      %v451 = vrot.slane %v444, %v450
      %v452 = vcombine.low %v118, %v124
      %v453 = vcombine.low %v130, %v136
      %v455 = vunpack.c.l.s4 1983009808
      %v456 = vunpack.c.0.s8 %v455
      %v457 = vlaneseq
      %v458 = vshrl.u32 %v457, 7
      %v459 = vsub.s32 %v456, %v458
      %v460 = vrot.slane %v452, %v459
      %v462 = vunpack.c.l.s4 1983009808
      %v463 = vunpack.c.0.s8 %v462
      %v464 = vlaneseq
      %v465 = vshrl.u32 %v464, 7
      %v466 = vsub.s32 %v463, %v465
      %v467 = vrot.slane %v453, %v466
      %v468 = vcombine.low %v460, %v467
      %v469 = vcombine.low %v142, %v148
      %v471 = vunpack.c.l.s4 1983009808
      %v472 = vunpack.c.0.s8 %v471
      %v473 = vlaneseq
      %v474 = vshrl.u32 %v473, 7
      %v475 = vsub.s32 %v472, %v474
      %v476 = vrot.slane %v469, %v475
      %vm477 = vcmask 1044484
      %v478 = vsel %vm477, %v443, %v443
      %vm479 = vcmask 1046534
      %v480 = vsel %vm479, %v443, %v478
      %v481 = vrot.slane %v468, 7
      %vm482 = vcmask 1041409
      %v483 = vsel %vm482, %v481, %v480
      %vm484 = vcmask 1043459
      %v485 = vsel %vm484, %v481, %v483
      %vm486 = vcmask 1045509
      %v487 = vsel %vm486, %v481, %v485
      %vm488 = vcmask 1047559
      %v489 = vsel %vm488, %v481, %v487
      %v490 = vsel %vm477, %v451, %v451
      %v491 = vsel %vm479, %v451, %v490
      %v492 = vrot.slane %v476, 7
      %v493 = vsel %vm482, %v492, %v491
      %v494 = vsel %vm484, %v492, %v493
      %v495 = vsel %vm486, %v492, %v494
      %v496 = vsel %vm488, %v492, %v495
      %v499 = vadd.f32 %v413, %v489
      %v500 = vadd.f32 %v414, %v496
      %501 = vst [vmem:[#allocation2] sm:$0xff] %v499
      %502 = vst [vmem:[#allocation2 + $0x8] sm:$0xf] %v500
      %v503 = vld [vmem:[#allocation3] sm:$0xff]
      %v504 = vld [vmem:[#allocation3 + $0x8] sm:$0xf]
      %v517 = vcombine.low %v172, %v178
      %v518 = vcombine.low %v184, %v190
      %v520 = vunpack.c.l.s4 1983009808
      %v521 = vunpack.c.0.s8 %v520
      %v522 = vlaneseq
      %v523 = vshrl.u32 %v522, 7
      %v524 = vsub.s32 %v521, %v523
      %v525 = vrot.slane %v517, %v524
      %v527 = vunpack.c.l.s4 1983009808
      %v528 = vunpack.c.0.s8 %v527
      %v529 = vlaneseq
      %v530 = vshrl.u32 %v529, 7
      %v531 = vsub.s32 %v528, %v530
      %v532 = vrot.slane %v518, %v531
      %v533 = vcombine.low %v525, %v532
      %v534 = vcombine.low %v196, %v202
      %v536 = vunpack.c.l.s4 1983009808
      %v537 = vunpack.c.0.s8 %v536
      %v538 = vlaneseq
      %v539 = vshrl.u32 %v538, 7
      %v540 = vsub.s32 %v537, %v539
      %v541 = vrot.slane %v534, %v540
      %v542 = vcombine.low %v208, %v214
      %v543 = vcombine.low %v220, %v226
      %v545 = vunpack.c.l.s4 1983009808
      %v546 = vunpack.c.0.s8 %v545
      %v547 = vlaneseq
      %v548 = vshrl.u32 %v547, 7
      %v549 = vsub.s32 %v546, %v548
      %v550 = vrot.slane %v542, %v549
      %v552 = vunpack.c.l.s4 1983009808
      %v553 = vunpack.c.0.s8 %v552
      %v554 = vlaneseq
      %v555 = vshrl.u32 %v554, 7
      %v556 = vsub.s32 %v553, %v555
      %v557 = vrot.slane %v543, %v556
      %v558 = vcombine.low %v550, %v557
      %v559 = vcombine.low %v232, %v238
      %v561 = vunpack.c.l.s4 1983009808
      %v562 = vunpack.c.0.s8 %v561
      %v563 = vlaneseq
      %v564 = vshrl.u32 %v563, 7
      %v565 = vsub.s32 %v562, %v564
      %v566 = vrot.slane %v559, %v565
      %v567 = vsel %vm477, %v533, %v533
      %v568 = vsel %vm479, %v533, %v567
      %v569 = vrot.slane %v558, 7
      %v570 = vsel %vm482, %v569, %v568
      %v571 = vsel %vm484, %v569, %v570
      %v572 = vsel %vm486, %v569, %v571
      %v573 = vsel %vm488, %v569, %v572
      %v574 = vsel %vm477, %v541, %v541
      %v575 = vsel %vm479, %v541, %v574
      %v576 = vrot.slane %v566, 7
      %v577 = vsel %vm482, %v576, %v575
      %v578 = vsel %vm484, %v576, %v577
      %v579 = vsel %vm486, %v576, %v578
      %v580 = vsel %vm488, %v576, %v579
      %v583 = vadd.f32 %v503, %v573
      %v584 = vadd.f32 %v504, %v580
      %585 = vst [vmem:[#allocation3] sm:$0xff] %v583
      %586 = vst [vmem:[#allocation3 + $0x8] sm:$0xf] %v584
    $region37: #{tpu_custom_call.1} parent=1 // pred_fallthru
      _
    // Predicated region
    $region38: #{tpu_custom_call.1} parent=1 // pred_check
      %p587 = pneg %p239
    $region39: #{tpu_custom_call.1} parent=1 // pred_check_branch
      %589 = sbr.rel (%p587) target = $region41
    $region40: #{tpu_custom_call.1} parent=1 // pred_region
      %v590 = vld [vmem:[#allocation9] sm:$0x3f]
      %s591 = sld [smem:[#allocation4]]
      %v592 = vld [vmem:[#allocation2] sm:$0xff]
      %v593 = vld [vmem:[#allocation2 + $0x8] sm:$0xf]
      %v595 = vlaneseq
      %v596 = vshrl.u32 %v595, 7
      %v597 = vsub.s32 0, %v596
      %v598 = vrot.slane %v590, %v597
      %v599 = vlaneseq
      %v600 = vshrl.u32 %v599, 7
      %v601 = vsub.s32 1, %v600
      %v602 = vrot.slane %v590, %v601
      %v603 = vlaneseq
      %v604 = vshrl.u32 %v603, 7
      %v605 = vsub.s32 2, %v604
      %v606 = vrot.slane %v590, %v605
      %v607 = vlaneseq
      %v608 = vshrl.u32 %v607, 7
      %v609 = vsub.s32 3, %v608
      %v610 = vrot.slane %v590, %v609
      %v611 = vlaneseq
      %v612 = vshrl.u32 %v611, 7
      %v613 = vsub.s32 4, %v612
      %v614 = vrot.slane %v590, %v613
      %v615 = vlaneseq
      %v616 = vshrl.u32 %v615, 7
      %v617 = vsub.s32 5, %v616
      %v618 = vrot.slane %v590, %v617
      %v619 = vcombine.low %v598, %v602
      %v620 = vcombine.low %v606, %v610
      %v622 = vunpack.c.l.s4 1983009808
      %v623 = vunpack.c.0.s8 %v622
      %v624 = vlaneseq
      %v625 = vshrl.u32 %v624, 7
      %v626 = vsub.s32 %v623, %v625
      %v627 = vrot.slane %v619, %v626
      %v629 = vunpack.c.l.s4 1983009808
      %v630 = vunpack.c.0.s8 %v629
      %v631 = vlaneseq
      %v632 = vshrl.u32 %v631, 7
      %v633 = vsub.s32 %v630, %v632
      %v634 = vrot.slane %v620, %v633
      %v635 = vcombine.low %v627, %v634
      %v636 = vcombine.low %v614, %v618
      %v638 = vunpack.c.l.s4 1983009808
      %v639 = vunpack.c.0.s8 %v638
      %v640 = vlaneseq
      %v641 = vshrl.u32 %v640, 7
      %v642 = vsub.s32 %v639, %v641
      %v643 = vrot.slane %v636, %v642
      %v646 = vmul.f32 %v592, %v635
      %v647 = vmul.f32 %v593, %v643
      %v650 = vcombine.high %v646, %v646
      %v652 = vunpack.c.l.s4 1983009808
      %v653 = vunpack.c.0.s8 %v652
      %v654 = vlaneseq
      %v655 = vshrl.u32 %v654, 7
      %v656 = vsub.s32 %v653, %v655
      %v657 = vrot.slane %v646, %v656
      %v659 = vunpack.c.l.s4 1983009808
      %v660 = vunpack.c.0.s8 %v659
      %v661 = vlaneseq
      %v662 = vshrl.u32 %v661, 7
      %v663 = vsub.s32 %v660, %v662
      %v664 = vrot.slane %v650, %v663
      %v665 = vcombine.high %v657, %v657
      %v666 = vcombine.high %v664, %v664
      %v668 = vunpack.c.l.s4 1983009808
      %v669 = vunpack.c.0.s8 %v668
      %v670 = vlaneseq
      %v671 = vshrl.u32 %v670, 7
      %v672 = vsub.s32 %v669, %v671
      %v673 = vrot.slane %v647, %v672
      %v674 = vcombine.high %v673, %v673
      %vm681 = vcmask 1041408
      %v682 = vsel %vm681, %v657, 0.0
      %v683 = vsel %vm681, %v665, 0.0
      %v684 = vadd.f32 %v682, %v683
      %v685 = vsel %vm681, %v664, 0.0
      %v686 = vadd.f32 %v684, %v685
      %v687 = vsel %vm681, %v666, 0.0
      %v688 = vadd.f32 %v686, %v687
      %v689 = vsel %vm681, %v673, 0.0
      %v690 = vadd.f32 %v688, %v689
      %v691 = vsel %vm681, %v674, 0.0
      %v692 = vadd.f32 %v690, %v691
      %693 = vadd.xlane.f32.xlu0 %v692
      %v694 = vpop.xlane.xlu0 %693
      %v695 = vstv %s591
      %v696 = vadd.f32 %v694, %v695
      %vm697 = vcmask 1024
      %698 = vst.msk [vmem:[%s4] sm:$0x3] %vm697, %v696
      %v699 = vld [vmem:[#allocation3] sm:$0xff]
      %v700 = vld [vmem:[#allocation3 + $0x8] sm:$0xf]
      %v701 = vmul.f32 %v699, %v635
      %v702 = vmul.f32 %v700, %v643
      %v705 = vcombine.high %v701, %v701
      %v707 = vunpack.c.l.s4 1983009808
      %v708 = vunpack.c.0.s8 %v707
      %v709 = vlaneseq
      %v710 = vshrl.u32 %v709, 7
      %v711 = vsub.s32 %v708, %v710
      %v712 = vrot.slane %v701, %v711
      %v714 = vunpack.c.l.s4 1983009808
      %v715 = vunpack.c.0.s8 %v714
      %v716 = vlaneseq
      %v717 = vshrl.u32 %v716, 7
      %v718 = vsub.s32 %v715, %v717
      %v719 = vrot.slane %v705, %v718
      %v720 = vcombine.high %v712, %v712
      %v721 = vcombine.high %v719, %v719
      %v723 = vunpack.c.l.s4 1983009808
      %v724 = vunpack.c.0.s8 %v723
      %v725 = vlaneseq
      %v726 = vshrl.u32 %v725, 7
      %v727 = vsub.s32 %v724, %v726
      %v728 = vrot.slane %v702, %v727
      %v729 = vcombine.high %v728, %v728
      %v736 = vsel %vm681, %v712, 0.0
      %v737 = vsel %vm681, %v720, 0.0
      %v738 = vadd.f32 %v736, %v737
      %v739 = vsel %vm681, %v719, 0.0
      %v740 = vadd.f32 %v738, %v739
      %v741 = vsel %vm681, %v721, 0.0
      %v742 = vadd.f32 %v740, %v741
      %v743 = vsel %vm681, %v728, 0.0
      %v744 = vadd.f32 %v742, %v743
      %v745 = vsel %vm681, %v729, 0.0
      %v746 = vadd.f32 %v744, %v745
      %747 = vadd.xlane.f32.xlu0 %v746
      %v748 = vpop.xlane.xlu0 %747
      %v749 = vadd.f32 %v748, %v695
      %750 = vst.msk [vmem:[%s5] sm:$0x3] %vm697, %v749
    $region41: #{tpu_custom_call.1} parent=1 // pred_fallthru
      _
    // Predicated region
    $region42: #{tpu_custom_call.1} parent=1 // pred_check
      _
    $region43: #{tpu_custom_call.1} parent=1 // pred_check_branch
      %752 = sbr.rel (0) target = $region45
    $region44: #{tpu_custom_call.1} parent=1 // pred_region
      _
    $region45: #{tpu_custom_call.1} parent=1 // pred_fallthru
      _
    // Predicated region
    $region46: #{tpu_custom_call.1} parent=1 // pred_check
      _
    $region47: #{tpu_custom_call.1} parent=1 // pred_check_branch
      %754 = sbr.rel (0) target = $region49
    $region48: #{tpu_custom_call.1} parent=1 // pred_region
      _
    $region49: #{tpu_custom_call.1} parent=1 // pred_fallthru
      _
    // Predicated region
    $region50: #{tpu_custom_call.1} parent=1 // pred_check
      _
    $region51: #{tpu_custom_call.1} parent=1 // pred_check_branch
      %756 = sbr.rel (0) target = $region53
    $region52: #{tpu_custom_call.1} parent=1 // pred_region
      _
    $region53: #{tpu_custom_call.1} parent=1 // pred_fallthru
      _
    // Predicated region
    $region54: #{tpu_custom_call.1} parent=1 // pred_check
      _
    $region55: #{tpu_custom_call.1} parent=1 // pred_check_branch
      %758 = sbr.rel (0) target = $region57
    $region56: #{tpu_custom_call.1} parent=1 // pred_region
      _
    $region57: #{tpu_custom_call.1} parent=1 // pred_fallthru
      _
    %759 = vsyncpa [#allocation6], 1
    %760 = vsyncpa [#allocation8], 1

</llo_original>
